<compile_context>
chip_gen: v6e
topology: v6e:2x2x1
jax: 0.10.0
libtpu: 0.0.40
codegen_flags: <defaults>
</compile_context>

<pallas_src>
import functools

import jax
import jax.numpy as jnp
from jax.experimental import pallas as pl
from jax.experimental.pallas import tpu as pltpu


def _round_up(v, m):
    return (v + m - 1) // m * m


def _patch_embed_kernel(x_ref, w_ref, b_ref, o_ref):
    # x_ref: (TM, K)  compute dtype   (tile of the flattened patch matrix)
    # w_ref: (K, E)   compute dtype   (VMEM-resident flattened conv weight)
    # b_ref: (1, E)   float32         (VMEM-resident bias row)
    # o_ref: (TM, E)  out dtype
    acc = jnp.dot(x_ref[...], w_ref[...], preferred_element_type=jnp.float32)
    o_ref[...] = (acc + b_ref[...]).astype(o_ref.dtype)


def _vmem_bytes(tm, K, E, compute_bytes, out_bytes):
    # double-buffered x tile + double-buffered out tile
    # + (currently double-buffered) resident weight + bias.
    return (2 * tm * K * compute_bytes
            + 2 * tm * E * out_bytes
            + 2 * K * E * compute_bytes
            + 2 * E * 4)


def _pick_tile_m(M, K, E, tile_m, compute_bytes, out_bytes,
                 vmem_budget=28 * 1024 * 1024):
    if M <= 8:
        return _round_up(max(M, 1), 8)
    # >= 2 grid steps whenever M allows, so both v7x TensorCores get work.
    tm = max(8, min(_round_up(tile_m, 8), _round_up((M + 1) // 2, 8)))
    # Shrink until the pipelined working set fits a conservative VMEM budget.
    while tm > 8 and _vmem_bytes(tm, K, E, compute_bytes, out_bytes) > vmem_budget:
        tm = max(8, _round_up(tm // 2, 8))
    # Prefer a tile that divides M exactly (no M padding, no de-pad slice),
    # as long as it does not blow up the grid-step count by more than ~1.5x.
    if M % tm != 0:
        lo = max((2 * tm) // 3, 8)
        cand = tm - 8
        while cand >= lo:
            if M % cand == 0:
                return cand
            cand -= 8
    return tm


def patch_embed(x, weight, bias, *, patch_size, tile_m=512,
                compute_dtype=jnp.bfloat16, out_dtype=None):
    """Equivalent of PatchEmbed.forward.

    x:      (B, C, H, W)   NCHW, like torch
    weight: (E, C, P, P)   torch Conv2d weight layout
    bias:   (E,)
    returns (B, num_patches, E)
    """
    B, C, H, W = x.shape
    E = weight.shape[0]
    P = patch_size
    GH, GW = H // P, W // P
    N = GH * GW
    K = C * P * P
    M = B * N
    if out_dtype is None:
        # NOTE: pass out_dtype=jnp.bfloat16 when downstream ops accept it; it
        # halves output HBM traffic and store-slot pressure (big win on v5e).
        out_dtype = x.dtype
    compute_bytes = jnp.dtype(compute_dtype).itemsize
    out_bytes = jnp.dtype(out_dtype).itemsize

    # --- glue: extract non-overlapping patches ------------------------------
    # Cast first so the transpose fusion writes the (narrow) compute dtype.
    xc = x[:, :, :GH * P, :GW * P].astype(compute_dtype)
    # (B, C, GH, P, GW, P) -> (B, GH, GW, C, P, P) -> (B*N, C*P*P)
    xp = xc.reshape(B, C, GH, P, GW, P).transpose(0, 2, 4, 1, 3, 5).reshape(M, K)

    # conv weight (E, C, P, P) -> (K, E) so that patches @ w matches
    # sum_{c,ph,pw} x[c,ph,pw] * W[e,c,ph,pw]
    w_flat = weight.reshape(E, K).T.astype(compute_dtype)
    b_row = bias.astype(jnp.float32).reshape(1, E)

    # --- tiling over the M = B*num_patches axis -----------------------------
    TM = _pick_tile_m(M, K, E, tile_m, compute_bytes, out_bytes)
    Mp = _round_up(M, TM)
    if Mp != M:
        xp = jnp.pad(xp, ((0, Mp - M), (0, 0)))
    grid = (Mp // TM,)

    vmem_need = _vmem_bytes(TM, K, E, compute_bytes, out_bytes)
    vmem_limit = int(min(48 * 1024 * 1024,
                         max(16 * 1024 * 1024, (vmem_need * 3) // 2)))

    cost = pl.CostEstimate(
        flops=2 * Mp * K * E,
        transcendentals=0,
        bytes_accessed=(Mp * K * compute_bytes + K * E * compute_bytes
                        + E * 4 + Mp * E * out_bytes),
    )

    out = pl.pallas_call(
        _patch_embed_kernel,
        out_shape=jax.ShapeDtypeStruct((Mp, E), out_dtype),
        grid_spec=pl.GridSpec(
            grid=grid,
            in_specs=[
                pl.BlockSpec((TM, K), lambda i: (i, 0)),   # patch-matrix tile
                pl.BlockSpec((K, E), lambda i: (0, 0)),    # resident weight
                pl.BlockSpec((1, E), lambda i: (0, 0)),    # resident bias
            ],
            out_specs=pl.BlockSpec((TM, E), lambda i: (i, 0)),
        ),
        compiler_params=pltpu.CompilerParams(
            dimension_semantics=("parallel",),             # shard M across TCs
            vmem_limit_bytes=vmem_limit,
        ),
        cost_estimate=cost,
    )(xp, w_flat, b_row)

    # De-pad only if padding was actually added (guarded: zero extra HBM pass
    # on the common path where TM divides M).
    if Mp != M:
        out = out[:M]
    return out.reshape(B, N, E)


def _trunc_normal_init(key, shape, std=0.02):
    # deterministic trunc-normal-ish init (same flavor as torch trunc_normal_)
    return jnp.clip(std * jax.random.normal(key, shape), -2 * std, 2 * std)


if __name__ == "__main__":
    # Small shapes consistent with the module semantics.
    B, C, H, W = 2, 4, 16, 16
    P = 4                 # patch_size
    E = 32                # embed_dim
    GH, GW = H // P, W // P
    N = GH * GW           # num_patches = 16

    key = jax.random.PRNGKey(0)
    kx, kw, kb = jax.random.split(key, 3)

    x = jax.random.normal(kx, (B, C, H, W), dtype=jnp.float32)
    weight = _trunc_normal_init(kw, (E, C, P, P))            # Conv2d weight
    bias = 0.01 * jax.random.normal(kb, (E,), dtype=jnp.float32)

    # pure-JAX conv reference
    ref = jax.lax.conv_general_dilated(
        x, weight, window_strides=(P, P), padding="VALID",
        dimension_numbers=("NCHW", "OIHW", "NCHW"),
    ) + bias.reshape(1, E, 1, 1)
    ref = ref.reshape(B, E, N).transpose(0, 2, 1)

    # f32 compute path (tight tolerance)
    fn_f32 = jax.jit(functools.partial(
        patch_embed, patch_size=P, compute_dtype=jnp.float32))
    out_f32 = jax.block_until_ready(fn_f32(x, weight, bias))
    assert out_f32.shape == (B, N, E), out_f32.shape
    assert jnp.allclose(out_f32, ref, atol=1e-5, rtol=1e-5)

    # bf16-input / f32-accumulate path (the production config; looser tol)
    fn_bf16 = jax.jit(functools.partial(
        patch_embed, patch_size=P, compute_dtype=jnp.bfloat16))
    out_bf16 = jax.block_until_ready(fn_bf16(x, weight, bias))
    assert out_bf16.shape == (B, N, E), out_bf16.shape
    assert jnp.allclose(out_bf16, ref, atol=3e-2, rtol=3e-2)

    print("KERNEL_OK")
</pallas_src>

<mosaic_0001>
module attributes {stable_mosaic.version = 11 : i64} {
  func.func @_patch_embed_kernel(%arg0: i32, %arg1: memref<16x64xf32, #tpu.memory_space<vmem>>, %arg2: memref<64x32xf32, #tpu.memory_space<vmem>>, %arg3: memref<1x32xf32, #tpu.memory_space<vmem>>, %arg4: memref<16x32xf32, #tpu.memory_space<vmem>>) attributes {dimension_semantics = [#tpu.dimension_semantics<parallel>], iteration_bounds = array<i64: 2>, scalar_prefetch = 0 : i64, scratch_operands = 0 : i64, tpu.core_type = #tpu.core_type<tc>, window_params = [{transform_indices = @transform_0, window_bounds = array<i64: 16, 64>}, {pipeline_mode = #tpu.pipeline_mode<synchronous>, transform_indices = @transform_1, window_bounds = array<i64: 64, 32>}, {pipeline_mode = #tpu.pipeline_mode<synchronous>, transform_indices = @transform_2, window_bounds = array<i64: 1, 32>}, {transform_indices = @transform_3, window_bounds = array<i64: 16, 32>}]} {
    %c0 = arith.constant 0 : index
    %c0_0 = arith.constant 0 : index
    %0 = vector.load %arg1[%c0, %c0_0] : memref<16x64xf32, #tpu.memory_space<vmem>>, vector<16x64xf32>
    %c0_1 = arith.constant 0 : index
    %c0_2 = arith.constant 0 : index
    %1 = vector.load %arg2[%c0_1, %c0_2] : memref<64x32xf32, #tpu.memory_space<vmem>>, vector<64x32xf32>
    %cst = arith.constant dense<0.000000e+00> : vector<16x32xf32>
    %2 = tpu.matmul %0, %1, %cst {dimension_numbers = #tpu.dot_dimension_numbers<[1], [0], [0], [1], [0, 0, 1, 1], [], []>} : vector<16x64xf32>, vector<64x32xf32>, vector<16x32xf32> -> vector<16x32xf32>
    %c0_3 = arith.constant 0 : index
    %c0_4 = arith.constant 0 : index
    %3 = vector.load %arg3[%c0_3, %c0_4] : memref<1x32xf32, #tpu.memory_space<vmem>>, vector<1x32xf32>
    %4 = vector.broadcast %3 : vector<1x32xf32> to vector<16x32xf32>
    %5 = arith.addf %2, %4 : vector<16x32xf32>
    %c0_5 = arith.constant 0 : index
    %c0_6 = arith.constant 0 : index
    %6 = vector.load %arg4[%c0_5, %c0_6] : memref<16x32xf32, #tpu.memory_space<vmem>>, vector<16x32xf32>
    tpu.vector_store %arg4[%c0_5, %c0_6], %5 {strides = array<i32>} : memref<16x32xf32, #tpu.memory_space<vmem>>, vector<16x32xf32>,
    return
  }
  func.func @transform_0(%arg0: i32) -> (i32, i32) {
    %c0_i32 = arith.constant 0 : i32
    %c0_i32_0 = arith.constant 0 : i32
    return %arg0, %c0_i32 : i32, i32
  }
  func.func @transform_1(%arg0: i32) -> (i32, i32) {
    %c0_i32 = arith.constant 0 : i32
    %c0_i32_0 = arith.constant 0 : i32
    %c0_i32_1 = arith.constant 0 : i32
    return %c0_i32, %c0_i32_0 : i32, i32
  }
  func.func @transform_2(%arg0: i32) -> (i32, i32) {
    %c0_i32 = arith.constant 0 : i32
    %c0_i32_0 = arith.constant 0 : i32
    %c0_i32_1 = arith.constant 0 : i32
    return %c0_i32, %c0_i32_0 : i32, i32
  }
  func.func @transform_3(%arg0: i32) -> (i32, i32) {
    %c0_i32 = arith.constant 0 : i32
    %c0_i32_0 = arith.constant 0 : i32
    return %arg0, %c0_i32 : i32, i32
  }
}

</mosaic_0001>

<llo_original>
// kernel: patch_embed.1
$region0: #{patch_embed.1}
  #allocation0 [shape = 'u32[]', space=smem, size = 0x4, offset = 0x4, fixed_abs, tag = 'smem constant byte address 0x4 - core index']
  #allocation1 [shape = 'u32[144,128]{1,0:T(1,128)}', space=vmem, size = 0x12000, scoped, tag = 'internal scratch']
  %s0 = inlined_call_operand.vmem [shape: f32[32,64], index: 0, kind: input, shape index: {}]
  %s1 = inlined_call_operand.vmem [shape: f32[64,32], index: 1, kind: input, shape index: {}]
  %s2 = inlined_call_operand.vmem [shape: f32[1,32], index: 2, kind: input, shape index: {}]
  %s3 = inlined_call_operand.hbm [shape: f32[32,32], index: 3, kind: output, shape index: {}]
  %s4 = sld [smem:[#allocation0]]
  $region45: #{patch_embed.1} parent=0
    _
  %s6 = ssub.s32 1, %s4
  %s7 = scalar_select 0, %s6, %s4
  $region1: #{patch_embed.1} parent=0
    #allocation2 [shape = 'u8[16384]{0}', space=vmem, size = 0x4000, scoped, tag = 'output window, operand 0']
    #allocation3 [shape = 's32[2]{0}', space=sflag, size = 0x8, scoped, tag = 'scoped memory for patch_embed.1']
    %8 = vsyncpa [#allocation3], 0
    %s9 = scalar_lea.sflag [#allocation3], 1
    %10 = vsyncpa %s9, 0
    loop: start=0, step=1, limit=4
    $region2: #{patch_embed.1} parent=1 // loop_pre_header
      _
    $region3: #{patch_embed.1} parent=1 // loop_header
      %s12 = sphi 0, %s16
      %p13 = scmp.ge.s32.totalorder %s12, 4
      %s22 = sphi 0, %s24
      %s25 = sphi 0, %s22
      %s26 = sphi 0, %s25
      %s42 = sphi 0, %s26
      %s46 = sphi 0, %s46
      %s48 = sphi 0, %s46
      %s49 = sphi 0, %s48
      %s63 = sphi 0, %s49
      %s67 = sphi 0, %s67
      %s69 = sphi 0, %s67
      %s70 = sphi 0, %s69
      %s84 = sphi 0, %s70
      %s90 = sphi 0, %s92
      %s93 = sphi 0, %s90
      %s94 = sphi 0, %s93
      %s110 = sphi 0, %s94
    $region4: #{patch_embed.1} parent=1 // loop_header_branch
      %15 = sbr.rel (%p13) target = $region8
    $region5: #{patch_embed.1} parent=1 // loop_body
      %s17 = ssub.s32 %s12, 1
      %s18 = ssub.s32 %s12, 2
      %s19 = sadd.s32 %s12, 1
      %s20 = ssub.s32 %s12, %s19
      %p21 = scmp.eq.s32.totalorder %s20, 0
      %s23 = sadd.s32 %s22, 1
      %s24 = scalar_select %p21, %s22, %s23
      %p27 = pneg %p21
      %p28 = scmp.eq.s32.totalorder %s12, 1
      %p29 = por %p27, %p28
      %p30 = scmp.ne.s32.totalorder %s22, %s25
      %p31 = scmp.eq.s32.totalorder %s12, 0
      %p32 = por %p30, %p31
      %p33 = scmp.ne.s32.totalorder %s22, %s25
      %p34 = scmp.eq.s32.totalorder %s17, 1
      %p35 = por %p33, %p34
      %p36 = scmp.ne.s32.totalorder %s25, %s26
      %p37 = scmp.eq.s32.totalorder %s17, 0
      %p38 = por %p36, %p37
      %p39 = scmp.ne.s32.totalorder %s25, %s26
      %p40 = scmp.eq.s32.totalorder %s18, 1
      %p41 = por %p39, %p40
      %p43 = scmp.ne.s32.totalorder %s26, %s42
      %p44 = scmp.eq.s32.totalorder %s18, 0
      %p45 = por %p43, %p44
      %s47 = sadd.s32 %s46, 1
      %p50 = scmp.eq.s32.totalorder %s12, 1
      %p51 = scmp.ne.s32.totalorder %s46, %s48
      %p52 = scmp.eq.s32.totalorder %s12, 0
      %p53 = por %p51, %p52
      %p54 = scmp.ne.s32.totalorder %s46, %s48
      %p55 = scmp.eq.s32.totalorder %s17, 1
      %p56 = por %p54, %p55
      %p57 = scmp.ne.s32.totalorder %s48, %s49
      %p58 = scmp.eq.s32.totalorder %s17, 0
      %p59 = por %p57, %p58
      %p60 = scmp.ne.s32.totalorder %s48, %s49
      %p61 = scmp.eq.s32.totalorder %s18, 1
      %p62 = por %p60, %p61
      %p64 = scmp.ne.s32.totalorder %s49, %s63
      %p65 = scmp.eq.s32.totalorder %s18, 0
      %p66 = por %p64, %p65
      %s68 = sadd.s32 %s67, 1
      %p71 = scmp.eq.s32.totalorder %s12, 1
      %p72 = scmp.ne.s32.totalorder %s67, %s69
      %p73 = scmp.eq.s32.totalorder %s12, 0
      %p74 = por %p72, %p73
      %p75 = scmp.ne.s32.totalorder %s67, %s69
      %p76 = scmp.eq.s32.totalorder %s17, 1
      %p77 = por %p75, %p76
      %p78 = scmp.ne.s32.totalorder %s69, %s70
      %p79 = scmp.eq.s32.totalorder %s17, 0
      %p80 = por %p78, %p79
      %p81 = scmp.ne.s32.totalorder %s69, %s70
      %p82 = scmp.eq.s32.totalorder %s18, 1
      %p83 = por %p81, %p82
      %p85 = scmp.ne.s32.totalorder %s70, %s84
      %p86 = scmp.eq.s32.totalorder %s18, 0
      %p87 = por %p85, %p86
      %s88 = ssub.s32 %s12, %s19
      %p89 = scmp.eq.s32.totalorder %s88, 0
      %s91 = sadd.s32 %s90, 1
      %s92 = scalar_select %p89, %s90, %s91
      %p95 = pneg %p89
      %p96 = scmp.eq.s32.totalorder %s12, 1
      %p97 = por %p95, %p96
      %p98 = scmp.ne.s32.totalorder %s90, %s93
      %p99 = scmp.eq.s32.totalorder %s12, 0
      %p100 = por %p98, %p99
      %p101 = scmp.ne.s32.totalorder %s90, %s93
      %p102 = scmp.eq.s32.totalorder %s17, 1
      %p103 = por %p101, %p102
      %p104 = scmp.ne.s32.totalorder %s93, %s94
      %p105 = scmp.eq.s32.totalorder %s17, 0
      %p106 = por %p104, %p105
      %p107 = scmp.ne.s32.totalorder %s93, %s94
      %p108 = scmp.eq.s32.totalorder %s18, 1
      %p109 = por %p107, %p108
      %p111 = scmp.ne.s32.totalorder %s94, %s110
      %p112 = scmp.eq.s32.totalorder %s18, 0
      %p113 = por %p111, %p112
      %p114 = scmp.le.s32.totalorder 1, %s12
      %p115 = scmp.lt.s32.totalorder %s12, 3
      %p116 = pnand %p114, %p115
      %p117 = pneg %p116
      // Predicated region
      $region9: #{patch_embed.1} parent=5 // pred_check
        _
      $region10: #{patch_embed.1} parent=5 // pred_check_branch
        %119 = sbr.rel (%p116) target = $region12
      $region11: #{patch_embed.1} parent=5 // pred_region
        %s120 = ssub.s32 %s12, 1
        // Predicated region
        $region13: #{patch_embed.1} parent=11 // pred_check
          %p121 = pneg %p59
        $region14: #{patch_embed.1} parent=11 // pred_check_branch
          %123 = sbr.rel (%p121) target = $region16
        $region15: #{patch_embed.1} parent=11 // pred_region
          _
        $region16: #{patch_embed.1} parent=11 // pred_fallthru
          _
        // Predicated region
        $region17: #{patch_embed.1} parent=11 // pred_check
          %p124 = pneg %p80
        $region18: #{patch_embed.1} parent=11 // pred_check_branch
          %126 = sbr.rel (%p124) target = $region20
        $region19: #{patch_embed.1} parent=11 // pred_region
          _
        $region20: #{patch_embed.1} parent=11 // pred_fallthru
          _
      $region12: #{patch_embed.1} parent=5 // pred_fallthru
        _
      %p127 = scmp.lt.s32.totalorder %s12, 2
      // Predicated region
      $region21: #{patch_embed.1} parent=5 // pred_check
        %p128 = pneg %p127
      $region22: #{patch_embed.1} parent=5 // pred_check_branch
        %130 = sbr.rel (%p128) target = $region24
      $region23: #{patch_embed.1} parent=5 // pred_region
        // Predicated region
        $region25: #{patch_embed.1} parent=23 // pred_check
          %p131 = pneg %p32
        $region26: #{patch_embed.1} parent=23 // pred_check_branch
          %133 = sbr.rel (%p131) target = $region28
        $region27: #{patch_embed.1} parent=23 // pred_region
          %s134 = smul.u32 2, %s12
          %p135 = scmp.lt.s32.totalorder %s134, 3
          %s136 = scalar_select %p135, %s134, 3
          %s137 = smul.addr %s136, 8
          %s138 = scalar_lea.vmem %s0, %s137
          %s139 = smul.u32 2, %s12
        $region28: #{patch_embed.1} parent=23 // pred_fallthru
          _
      $region24: #{patch_embed.1} parent=5 // pred_fallthru
        _
      %p140 = scmp.le.s32.totalorder 1, %s12
      %p141 = scmp.lt.s32.totalorder %s12, 3
      %p142 = pnand %p140, %p141
      %p143 = pneg %p142
      // Predicated region
      $region29: #{patch_embed.1} parent=5 // pred_check
        _
      $region30: #{patch_embed.1} parent=5 // pred_check_branch
        %145 = sbr.rel (%p142) target = $region32
      $region31: #{patch_embed.1} parent=5 // pred_region
        %s146 = ssub.s32 %s12, 1
        %s147 = smul.u32 2, %s17
        %p148 = scmp.lt.s32.totalorder %s147, 3
        %s149 = scalar_select %p148, %s147, 3
        %s150 = smul.addr %s149, 8
        %s151 = scalar_lea.vmem %s0, %s150
        %p152 = pneg %p38
        %p153 = pneg %p35
        %p154 = pneg %p59
        %p155 = pneg %p56
        %p156 = pneg %p80
        %p157 = pneg %p77
        %p158 = pneg %p106
        %p159 = pneg %p103
        %s160 = sand.u32 %s93, 1
        %s161 = scalar_lea.sflag [#allocation3], %s160
        %s162 = sand.u32 %s93, 1
        %s163 = smul.addr %s162, 16
        %s164 = scalar_lea.vmem [#allocation2], %s163
        %s165 = smul.u32 2, %s17
        %p166 = scmp.lt.s32.totalorder %s165, 3
        %s167 = scalar_select %p166, %s165, 3
        %s168 = smul.addr %s167, 8
        %s169 = scalar_lea.vmem %s0, %s168
        %s170 = smul.u32 2, %s17
        %s171 = smul.u32 2, %s17
        %v172 = vld [vmem:[%s169] sm:$0xff]
        %v173 = vld [vmem:[%s169 + $0x8] sm:$0xff]
        %v174 = vld [vmem:[%s1] sm:$0xff]
        %v175 = vld [vmem:[%s1 + $0x8] sm:$0xff]
        %v176 = vld [vmem:[%s1 + $0x10] sm:$0xff]
        %v177 = vld [vmem:[%s1 + $0x18] sm:$0xff]
        %v178 = vld [vmem:[%s1 + $0x20] sm:$0xff]
        %v179 = vld [vmem:[%s1 + $0x28] sm:$0xff]
        %v180 = vld [vmem:[%s1 + $0x30] sm:$0xff]
        %v181 = vld [vmem:[%s1 + $0x38] sm:$0xff]
        %v182 = vld [vmem:[%s2] sm:$0x1]
        %v184 = vlaneseq
        %v185 = vshrl.u32 %v184, 7
        %v186 = vsub.s32 0, %v185
        %v187 = vrot.slane %v182, %v186
        %vm189 = vcmask 523264
        %v191 = vsel %vm189, %v172, 0
        %v194 = vsel %vm189, %v173, 0
        %196 = vmatprep.subr.mxu0 0.0
        %197 = vmatpush1.msra.mxu0 0.0
        %198 = vmatprep.subr.mxu0 0.0
        %199 = vmatpush1.msra.mxu0 0.0
        %200 = vmatprep.subr.mxu0 0.0
        %201 = vmatpush1.msra.mxu0 0.0
        %202 = vmatprep.subr.mxu0 0.0
        %203 = vmatpush1.msra.mxu0 0.0
        %204 = vmatprep.subr.mxu0 0.0
        %205 = vmatpush1.msra.mxu0 0.0
        %206 = vmatprep.subr.mxu0 0.0
        %207 = vmatpush1.msra.mxu0 0.0
        %208 = vmatprep.subr.mxu0 0.0
        %209 = vmatpush1.msra.mxu0 0.0
        %210 = vmatprep.subr.mxu0 0.0
        %211 = vmatpush1.msra.mxu0 0.0
        %212 = vmatprep.subr.mxu0 0.0
        %213 = vmatpush1.msra.mxu0 %v181
        %214 = vmatprep.subr.mxu0 0.0
        %215 = vmatpush1.msra.mxu0 %v180
        %216 = vmatprep.subr.mxu0 0.0
        %217 = vmatpush1.msra.mxu0 %v179
        %218 = vmatprep.subr.mxu0 0.0
        %219 = vmatpush1.msra.mxu0 %v178
        %220 = vmatprep.subr.mxu0 0.0
        %221 = vmatpush1.msra.mxu0 %v177
        %222 = vmatprep.subr.mxu0 0.0
        %223 = vmatpush1.msra.mxu0 %v176
        %224 = vmatprep.subr.mxu0 0.0
        %225 = vmatpush1.msra.mxu0 %v175
        %226 = vmatprep.subr.mxu0 0.0
        %227 = vmatpush1.msra.mxu0 %v174
        %228 = vmatprep.subr.mxu0 0.0
        %229 = vmatpush2.msra.mxu0 0.0
        %230 = vmatprep.subr.mxu0 0.0
        %231 = vmatpush2.msra.mxu0 0.0
        %232 = vmatprep.subr.mxu0 0.0
        %233 = vmatpush2.msra.mxu0 0.0
        %234 = vmatprep.subr.mxu0 0.0
        %235 = vmatpush2.msra.mxu0 0.0
        %236 = vmatprep.subr.mxu0 0.0
        %237 = vmatpush2.msra.mxu0 0.0
        %238 = vmatprep.subr.mxu0 0.0
        %239 = vmatpush2.msra.mxu0 0.0
        %240 = vmatprep.subr.mxu0 0.0
        %241 = vmatpush2.msra.mxu0 0.0
        %242 = vmatprep.subr.mxu0 0.0
        %243 = vmatpush2.msra.mxu0 0.0
        %244 = vmatprep.subr.mxu0 0.0
        %245 = vmatpush2.msra.mxu0 0.0
        %246 = vmatprep.subr.mxu0 0.0
        %247 = vmatpush2.msra.mxu0 0.0
        %248 = vmatprep.subr.mxu0 0.0
        %249 = vmatpush2.msra.mxu0 0.0
        %250 = vmatprep.subr.mxu0 0.0
        %251 = vmatpush2.msra.mxu0 0.0
        %252 = vmatprep.subr.mxu0 0.0
        %253 = vmatpush2.msra.mxu0 0.0
        %254 = vmatprep.subr.mxu0 0.0
        %255 = vmatpush2.msra.mxu0 0.0
        %256 = vmatprep.subr.mxu0 0.0
        %257 = vmatpush2.msra.mxu0 0.0
        %258 = vmatprep.subr.mxu0 0.0
        %259 = vmatpush2.msra.mxu0 0.0
        %260 = vmatprep.mubr.f32.mxu0 0.0
        %261 = vmatmul.mubr.f32.gmra.mxu0 %v191
        %v262 = vpop.f32.mrf.mxu0
        %v263 = vadd.f32 %v187, %v262
        %v264 = vpop.f32.mrf.mxu0
        %265 = vmatprep.mubr.f32.mxu0 0.0
        %266 = vmatmul.mubr.f32.gmra.mxu0 %v194
        %v267 = vpop.f32.mrf.mxu0
        %v268 = vadd.f32 %v187, %v267
        %v269 = vpop.f32.mrf.mxu0
        %270 = vdwg.mxu0
        %vm271 = vcmask 261120
        %272 = vst.msk [vmem:[%s164] sm:$0xff] %vm271, %v263
        %273 = vst.msk [vmem:[%s164 + $0x8] sm:$0xff] %vm271, %v268
        %s274 = sand.u32 %s93, 1
        %s275 = scalar_lea.sflag [#allocation3], %s274
        %s276 = sand.u32 %s93, 1
        %s277 = smul.addr %s276, 16
        %s278 = scalar_lea.vmem [#allocation2], %s277
        // Predicated region
        $region33: #{patch_embed.1} parent=31 // pred_check
          %p279 = pneg %p103
        $region34: #{patch_embed.1} parent=31 // pred_check_branch
          %281 = sbr.rel (%p279) target = $region36
        $region35: #{patch_embed.1} parent=31 // pred_region
          %s282 = smul.u32 2, %s17
          %s284 = ssub.s32 256, 256
          %285 = vsyncadd %s275, %s284
          %s286 = smul.addr %s282, 128
          %s287 = scalar_lea.hbm %s3, %s286
          %s288 = sshll.u32 %s278, 4
          %s289 = int_to_ptr.vmem [resolvable:$true] %s288
          %294 = dma.vmem_to_hbm [thread:$0]  %s289, 256, %s287, %s275, 128, 128, 8
        $region36: #{patch_embed.1} parent=31 // pred_fallthru
          _
      $region32: #{patch_embed.1} parent=5 // pred_fallthru
        _
      %p295 = scmp.le.s32.totalorder 2, %s12
      // Predicated region
      $region37: #{patch_embed.1} parent=5 // pred_check
        %p296 = pneg %p295
      $region38: #{patch_embed.1} parent=5 // pred_check_branch
        %298 = sbr.rel (%p296) target = $region40
      $region39: #{patch_embed.1} parent=5 // pred_region
        %s299 = ssub.s32 %s12, 2
        // Predicated region
        $region41: #{patch_embed.1} parent=39 // pred_check
          %p300 = pneg %p109
        $region42: #{patch_embed.1} parent=39 // pred_check_branch
          %302 = sbr.rel (%p300) target = $region44
        $region43: #{patch_embed.1} parent=39 // pred_region
          %s303 = sand.u32 %s94, 1
          %s304 = scalar_lea.sflag [#allocation3], %s303
          %s305 = sand.u32 %s94, 1
          %s306 = smul.addr %s305, 16
          %s307 = scalar_lea.vmem [#allocation2], %s306
          %308 = dma.done %s304, 256
        $region44: #{patch_embed.1} parent=39 // pred_fallthru
          _
      $region40: #{patch_embed.1} parent=5 // pred_fallthru
        _
    $region6: #{patch_embed.1} parent=1 // loop_footer
      %s16 = sadd.s32 1, %s12
    $region7: #{patch_embed.1} parent=1 // loop_footer_branch
      %11 = sbr.rel target = $region3
    $region8: #{patch_embed.1} parent=1 // loop_exit
      _
    %309 = vsyncpa [#allocation3], 1
    %s310 = scalar_lea.sflag [#allocation3], 1
    %311 = vsyncpa %s310, 1

</llo_original>
